<compile_context>
chip_gen: v6e
topology: v6e:2x2x1
jax: 0.10.0
libtpu: 0.0.40
codegen_flags: <defaults>
</compile_context>

<pallas_src>
import jax
import jax.numpy as jnp
import numpy as np
from jax.experimental import pallas as pl
from jax.experimental.pallas import tpu as pltpu


def _flatten_shape(x: jax.Array, full: bool) -> tuple:
    """Output shape of Flatten(full).forward(x)."""
    B = x.shape[0] if x.ndim >= 1 else 1
    N = int(np.prod(x.shape[1:])) if x.ndim > 1 else 1
    return (B * N,) if full else (B, N)


def _dma_copy_kernel(x_hbm, o_hbm, sem):
    # One whole-array HBM -> HBM DMA.  No VMEM staging, no vector load/store
    # bundle work, no grid: the DMA engine does the entire copy.
    cp = pltpu.make_async_copy(x_hbm, o_hbm, sem)
    cp.start()
    cp.wait()


def flatten(x: jax.Array, full: bool = False) -> jax.Array:
    """Equivalent of PyTorch Flatten(full).forward(x).

    torch's `.view` on a contiguous tensor moves no data, so the faithful (and
    fastest) translation is a pure metadata reshape — no Pallas kernel, no HBM
    read/write.
    """
    return jnp.reshape(x, _flatten_shape(x, full))


def flatten_materialized(x: jax.Array, full: bool = False) -> jax.Array:
    """Same semantics, but guarantees a physically new output buffer.

    The flattened view is produced by `jnp.reshape` (layout glue only); the
    copy into fresh memory is a single Pallas HBM->HBM DMA over the whole
    array.  Works for any shape/dtype (ragged sizes need no padding) and uses
    zero VMEM, so it behaves identically on v5e / v6e / v7x.
    """
    out_shape = _flatten_shape(x, full)
    flat = jnp.reshape(x, out_shape)  # metadata only; matches torch .view
    nbytes = int(np.prod(out_shape)) * jnp.dtype(x.dtype).itemsize

    return pl.pallas_call(
        _dma_copy_kernel,
        out_shape=jax.ShapeDtypeStruct(out_shape, x.dtype),
        in_specs=[pl.BlockSpec(memory_space=pl.ANY)],   # raw HBM ref, no auto-DMA
        out_specs=pl.BlockSpec(memory_space=pl.ANY),    # raw HBM ref, no auto-DMA
        scratch_shapes=[pltpu.SemaphoreType.DMA],       # one DMA-completion sem
        cost_estimate=pl.CostEstimate(
            flops=0, transcendentals=0, bytes_accessed=2 * nbytes),
    )(flat)


if __name__ == "__main__":
    key = jax.random.PRNGKey(0)
    # Small NCHW input consistent with a conv-net feature map.
    B, C, H, W = 2, 4, 16, 16
    x = jax.random.normal(key, (B, C, H, W), dtype=jnp.float32)
    ref2d = np.asarray(x).reshape(B, -1)
    ref1d = np.asarray(x).reshape(-1)

    # ---- Default path: zero-cost metadata reshape (no kernel launched). ----
    y = jax.block_until_ready(flatten(x, full=False))
    assert y.shape == (B, C * H * W), y.shape
    np.testing.assert_array_equal(np.asarray(y), ref2d)

    y_full = jax.block_until_ready(flatten(x, full=True))
    assert y_full.shape == (B * C * H * W,), y_full.shape
    np.testing.assert_array_equal(np.asarray(y_full), ref1d)

    # ---- Pallas path: fresh buffer via a single HBM->HBM DMA. ----
    z = jax.block_until_ready(flatten_materialized(x, full=False))
    assert z.shape == (B, C * H * W), z.shape
    np.testing.assert_array_equal(np.asarray(z), ref2d)

    z_full = jax.block_until_ready(flatten_materialized(x, full=True))
    assert z_full.shape == (B * C * H * W,), z_full.shape
    np.testing.assert_array_equal(np.asarray(z_full), ref1d)

    # Non-multiple-of-128 feature count: no padding / slice-back anymore.
    x_odd = jax.random.normal(jax.random.PRNGKey(0), (2, 3, 5, 7), dtype=jnp.float32)
    z_odd = jax.block_until_ready(flatten_materialized(x_odd, full=False))
    np.testing.assert_array_equal(np.asarray(z_odd), np.asarray(x_odd).reshape(2, -1))

    # bf16 activations take the same path (raw-byte DMA, no sublane packing issues).
    x_bf = jax.random.normal(jax.random.PRNGKey(0), (2, 4, 16, 16), dtype=jnp.bfloat16)
    z_bf = jax.block_until_ready(flatten_materialized(x_bf, full=True))
    np.testing.assert_array_equal(np.asarray(z_bf), np.asarray(x_bf).reshape(-1))

    print("KERNEL_OK")
</pallas_src>

<mosaic_0001>
module attributes {stable_mosaic.version = 11 : i64} {
  func.func @_dma_copy_kernel(%arg0: memref<2x1024xf32, #tpu.memory_space<any>>, %arg1: memref<2x1024xf32, #tpu.memory_space<any>>, %arg2: memref<!tpu.dma_semaphore, #tpu.memory_space<semaphore_mem>>) attributes {dimension_semantics = [], scalar_prefetch = 0 : i64, scratch_operands = 1 : i64, tpu.core_type = #tpu.core_type<tc>} {
    tpu.enqueue_dma source(%arg0 : memref<2x1024xf32, #tpu.memory_space<any>>) target(%arg1 : memref<2x1024xf32, #tpu.memory_space<any>>) target_semaphore(%arg2 : memref<!tpu.dma_semaphore, #tpu.memory_space<semaphore_mem>>)
    tpu.wait_dma2 semaphore(%arg2 : memref<!tpu.dma_semaphore, #tpu.memory_space<semaphore_mem>>) src(%arg0 : memref<2x1024xf32, #tpu.memory_space<any>>) dst(%arg1 : memref<2x1024xf32, #tpu.memory_space<any>>)
    return
  }
}

</mosaic_0001>

<llo_original>
// kernel: tpu_custom_call.1
$region0: #{tpu_custom_call.1}
  #allocation0 [shape = 'u32[]', space=smem, size = 0x4, offset = 0x4, fixed_abs, tag = 'smem constant byte address 0x4 - core index']
  #allocation1 [shape = 'u32[144,128]{1,0:T(1,128)}', space=vmem, size = 0x12000, scoped, tag = 'internal scratch']
  #allocation2 [shape = 's32[1]{0}', space=sflag, size = 0x4, scoped, tag = 'scratch operand']
  #allocation3 [shape = 's32[]', space=sflag, size = 0x4, offset = 0, fixed_abs, tag = 'sflag constant byte address 0x0 - dummy sync flag']
  #allocation4 [shape = 'u32[0]{0}', space=smem, size = 0, offset = 0, fixed_abs, tag = 'smem constant byte address 0x0 - null']
  %s0 = inlined_call_operand.hbm [shape: f32[2,1024], index: 0, kind: input, shape index: {}]
  %s1 = inlined_call_operand.hbm [shape: f32[2,1024], index: 1, kind: output, shape index: {}]
  %s2 = sld [smem:[#allocation0]]
  $region2: #{tpu_custom_call.1} parent=0
    _
  %s4 = ssub.s32 1, %s2
  %s5 = scalar_select 0, %s4, %s2
  %s7 = sshll.u32 1, 14
  %s8 = sxor.u32 4294967295, %s7
  %12 = dma.general %s0, 256, %s1, [#allocation2], 131072, [#allocation4], 0, 0
  %s13 = smul.u32 2, 1
  %s14 = smul.u32 %s13, 8
  %s15 = sshll.u32 %s14, 4
  %16 = dma.done [#allocation2], %s15
  %17 = vsyncmov [#allocation2]
  %s18 = vpop.sfrf %17
  %p19 = scmp.eq.s32.totalorder %s18, 0
  %p20 = pneg %p19
  %22 = shalt.err (%p20)

</llo_original>
